<compile_context>
chip_gen: v6e
topology: v6e:2x2x1
jax: 0.10.0
libtpu: 0.0.40
codegen_flags: <defaults>
</compile_context>

<pallas_src>
import functools

import jax
import jax.numpy as jnp
from jax.experimental import pallas as pl
from jax.experimental.pallas import tpu as pltpu


PAD = 128        # lane / MXU aligned width for all padded feature dims
N_LAYERS = 5


def _fused_mlp_kernel(x_ref, w_ref, b_ref, o_ref, *, in_k, num_sub):
    """5x fused (h @ W + b -> ReLU) on one batch block.

    x_ref: (blk_B, in_k)      bf16   (real input width, sublane-rounded)
    w_ref: (5, 128, 128)      bf16   (pre-transposed, zero-padded, VMEM-resident)
    b_ref: (5, 1, 128)        f32
    o_ref: (blk_B, 128)       bf16   (lane-dense padded output slab)
    """
    blk_b = x_ref.shape[0]
    sub = blk_b // num_sub

    # First layer uses only the real input rows of W1 (rest are zero padding).
    w1 = w_ref[0][:in_k, :]                       # bf16 (in_k, 128)
    b1 = b_ref[0]                                 # f32  (1, 128)

    # num_sub independent activation chains -> MXU/VPU overlap inside a block.
    hs = [x_ref[pl.ds(s * sub, sub), :] for s in range(num_sub)]

    accs = [jnp.dot(h, w1, preferred_element_type=jnp.float32) for h in hs]
    accs = [jnp.maximum(a + b1, 0.0) for a in accs]
    hs = [a.astype(jnp.bfloat16) for a in accs]

    for l in range(1, N_LAYERS):
        wl = w_ref[l]                             # bf16 (128, 128)
        bl = b_ref[l]                             # f32  (1, 128)
        accs = [jnp.dot(h, wl, preferred_element_type=jnp.float32) for h in hs]
        accs = [jnp.maximum(a + bl, 0.0) for a in accs]
        hs = [a.astype(jnp.bfloat16) for a in accs]

    for s in range(num_sub):
        o_ref[pl.ds(s * sub, sub), :] = hs[s]


def init_linear(key, in_dim, out_dim, dtype=jnp.float32):
    """Deterministic init matching nn.Linear shapes (uniform +-1/sqrt(in))."""
    kw, kb = jax.random.split(key)
    bound = 1.0 / jnp.sqrt(jnp.asarray(in_dim, dtype))
    w = jax.random.uniform(kw, (out_dim, in_dim), dtype, -bound, bound)
    b = jax.random.uniform(kb, (out_dim,), dtype, -bound, bound)
    return w, b


def make_fat_middle_linear_params(key, thin_dim, fat_dim):
    dims = [
        (thin_dim, thin_dim),
        (thin_dim, fat_dim),
        (fat_dim, fat_dim),
        (fat_dim, thin_dim),
        (thin_dim, thin_dim),
    ]
    keys = jax.random.split(key, len(dims))
    return [init_linear(k, i, o) for k, (i, o) in zip(keys, dims)]


def prepare_fused_params(params):
    """One-time layout plumbing:
    list of ((out,in) f32 W, (out,) f32 b) -> stacked padded
    (5,128,128) bf16 W^T slab + (5,1,128) f32 bias slab."""
    w_stack = jnp.zeros((N_LAYERS, PAD, PAD), jnp.float32)
    b_stack = jnp.zeros((N_LAYERS, 1, PAD), jnp.float32)
    for l, (w, b) in enumerate(params):
        out_dim, in_dim = w.shape
        w_stack = w_stack.at[l, :in_dim, :out_dim].set(w.T)
        b_stack = b_stack.at[l, 0, :out_dim].set(b)
    return w_stack.astype(jnp.bfloat16), b_stack


@functools.partial(jax.jit, static_argnames=("out_dim",))
def fat_middle_linear(x, w_stack, b_stack, out_dim):
    """x:(B, thin_dim) f32 -> (B, out_dim) f32 through 5 fused Linear+ReLU layers."""
    B, in_dim = x.shape

    # bf16 sublane packing: round the real input width and batch up to 16.
    in_k = max(16, ((in_dim + 15) // 16) * 16)
    Bp = max(16, ((B + 15) // 16) * 16)

    # Batch block size: single block for small batches, else 1024-row tiles
    # (well under the 16 MiB v5e scoped-VMEM default; weights stay resident).
    if Bp <= 1024:
        blk_B = Bp
    else:
        blk_B = 1024
    grid_n = pl.cdiv(Bp, blk_B)
    Bp = grid_n * blk_B                      # make the grid exact

    # Cast to bf16; only pad batch rows / sublane-round the input width
    # (no 128-wide input pad -> no 4x inflated input reads).
    x_b = x.astype(jnp.bfloat16)
    if (Bp, in_k) != (B, in_dim):
        x_b = jnp.zeros((Bp, in_k), jnp.bfloat16).at[:B, :in_dim].set(x_b)

    # Two independent sub-chains per block when each half is >= 16 rows.
    num_sub = 2 if (blk_B >= 32 and blk_B % 32 == 0) else 1

    kernel = functools.partial(_fused_mlp_kernel, in_k=in_k, num_sub=num_sub)

    flops = 2 * N_LAYERS * Bp * PAD * PAD
    bytes_accessed = (x_b.size * 2            # bf16 input
                      + w_stack.size * 2      # bf16 weights
                      + b_stack.size * 4      # f32 biases
                      + Bp * PAD * 2)         # bf16 output

    out_pad = pl.pallas_call(
        kernel,
        out_shape=jax.ShapeDtypeStruct((Bp, PAD), jnp.bfloat16),
        grid=(grid_n,),
        in_specs=[
            pl.BlockSpec((blk_B, in_k), lambda i: (i, 0)),          # streamed x
            pl.BlockSpec((N_LAYERS, PAD, PAD), lambda i: (0, 0, 0)),  # resident W
            pl.BlockSpec((N_LAYERS, 1, PAD), lambda i: (0, 0, 0)),    # resident b
        ],
        out_specs=pl.BlockSpec((blk_B, PAD), lambda i: (i, 0)),
        compiler_params=pltpu.CompilerParams(
            dimension_semantics=("parallel",)),
        cost_estimate=pl.CostEstimate(
            flops=flops, transcendentals=0, bytes_accessed=bytes_accessed),
    )(x_b, w_stack, b_stack)

    # Slice off batch/feature padding; return f32 for module-interface parity.
    return out_pad[:B, :out_dim].astype(jnp.float32)


if __name__ == "__main__":
    key = jax.random.PRNGKey(0)
    k_params, k_x = jax.random.split(key)

    batch = 8
    thin_dim = 32
    fat_dim = 128

    params = make_fat_middle_linear_params(k_params, thin_dim, fat_dim)
    w_stack, b_stack = prepare_fused_params(params)
    x = jax.random.normal(k_x, (batch, thin_dim), jnp.float32)

    out = fat_middle_linear(x, w_stack, b_stack, out_dim=thin_dim)
    jax.block_until_ready(out)

    # Pure-JAX f32 reference (bf16 MXU path -> compare with tolerance).
    ref = x
    for w, b in params:
        ref = jnp.maximum(ref @ w.T + b, 0.0)

    assert out.shape == (batch, thin_dim)
    assert bool(jnp.all(out >= 0.0))
    assert bool(jnp.allclose(out, ref, rtol=1e-1, atol=1e-1))

    print("KERNEL_OK")
</pallas_src>

<mosaic_0001>
module attributes {stable_mosaic.version = 11 : i64} {
  func.func @_fused_mlp_kernel(%arg0: i32, %arg1: memref<16x32xbf16, #tpu.memory_space<vmem>>, %arg2: memref<5x128x128xbf16, #tpu.memory_space<vmem>>, %arg3: memref<5x1x128xf32, #tpu.memory_space<vmem>>, %arg4: memref<16x128xbf16, #tpu.memory_space<vmem>>) attributes {dimension_semantics = [#tpu.dimension_semantics<parallel>], iteration_bounds = array<i64: 1>, scalar_prefetch = 0 : i64, scratch_operands = 0 : i64, tpu.core_type = #tpu.core_type<tc>, window_params = [{transform_indices = @transform_0, window_bounds = array<i64: 16, 32>}, {pipeline_mode = #tpu.pipeline_mode<synchronous>, transform_indices = @transform_1, window_bounds = array<i64: 5, 128, 128>}, {pipeline_mode = #tpu.pipeline_mode<synchronous>, transform_indices = @transform_2, window_bounds = array<i64: 5, 1, 128>}, {transform_indices = @transform_3, window_bounds = array<i64: 16, 128>}]} {
    %c0 = arith.constant 0 : index
    %c0_0 = arith.constant 0 : index
    %c0_1 = arith.constant 0 : index
    %0 = vector.load %arg2[%c0, %c0_0, %c0_1] : memref<5x128x128xbf16, #tpu.memory_space<vmem>>, vector<1x128x128xbf16>
    %1 = vector.shape_cast %0 : vector<1x128x128xbf16> to vector<128x128xbf16>
    %2 = vector.extract_strided_slice %1 {offsets = [0, 0], sizes = [32, 128], strides = [1, 1]} : vector<128x128xbf16> to vector<32x128xbf16>
    %c0_2 = arith.constant 0 : index
    %c0_3 = arith.constant 0 : index
    %c0_4 = arith.constant 0 : index
    %3 = vector.load %arg3[%c0_2, %c0_3, %c0_4] : memref<5x1x128xf32, #tpu.memory_space<vmem>>, vector<1x1x128xf32>
    %4 = vector.shape_cast %3 : vector<1x1x128xf32> to vector<1x128xf32>
    %c0_5 = arith.constant 0 : index
    %c0_6 = arith.constant 0 : index
    %5 = vector.load %arg1[%c0_5, %c0_6] : memref<16x32xbf16, #tpu.memory_space<vmem>>, vector<16x32xbf16>
    %cst = arith.constant dense<0.000000e+00> : vector<16x128xf32>
    %6 = tpu.matmul %5, %2, %cst {dimension_numbers = #tpu.dot_dimension_numbers<[1], [0], [0], [1], [0, 0, 1, 1], [], []>} : vector<16x32xbf16>, vector<32x128xbf16>, vector<16x128xf32> -> vector<16x128xf32>
    %7 = vector.broadcast %4 : vector<1x128xf32> to vector<16x128xf32>
    %8 = arith.addf %6, %7 : vector<16x128xf32>
    %cst_7 = arith.constant 0.000000e+00 : f32
    %9 = vector.broadcast %cst_7 : f32 to vector<16x128xf32>
    %10 = arith.maximumf %8, %9 : vector<16x128xf32>
    %11 = arith.truncf %10 : vector<16x128xf32> to vector<16x128xbf16>
    %c1 = arith.constant 1 : index
    %c0_8 = arith.constant 0 : index
    %c0_9 = arith.constant 0 : index
    %12 = vector.load %arg2[%c1, %c0_8, %c0_9] : memref<5x128x128xbf16, #tpu.memory_space<vmem>>, vector<1x128x128xbf16>
    %13 = vector.shape_cast %12 : vector<1x128x128xbf16> to vector<128x128xbf16>
    %c1_10 = arith.constant 1 : index
    %c0_11 = arith.constant 0 : index
    %c0_12 = arith.constant 0 : index
    %14 = vector.load %arg3[%c1_10, %c0_11, %c0_12] : memref<5x1x128xf32, #tpu.memory_space<vmem>>, vector<1x1x128xf32>
    %15 = vector.shape_cast %14 : vector<1x1x128xf32> to vector<1x128xf32>
    %cst_13 = arith.constant dense<0.000000e+00> : vector<16x128xf32>
    %16 = tpu.matmul %11, %13, %cst_13 {dimension_numbers = #tpu.dot_dimension_numbers<[1], [0], [0], [1], [0, 0, 1, 1], [], []>} : vector<16x128xbf16>, vector<128x128xbf16>, vector<16x128xf32> -> vector<16x128xf32>
    %17 = vector.broadcast %15 : vector<1x128xf32> to vector<16x128xf32>
    %18 = arith.addf %16, %17 : vector<16x128xf32>
    %cst_14 = arith.constant 0.000000e+00 : f32
    %19 = vector.broadcast %cst_14 : f32 to vector<16x128xf32>
    %20 = arith.maximumf %18, %19 : vector<16x128xf32>
    %21 = arith.truncf %20 : vector<16x128xf32> to vector<16x128xbf16>
    %c2 = arith.constant 2 : index
    %c0_15 = arith.constant 0 : index
    %c0_16 = arith.constant 0 : index
    %22 = vector.load %arg2[%c2, %c0_15, %c0_16] : memref<5x128x128xbf16, #tpu.memory_space<vmem>>, vector<1x128x128xbf16>
    %23 = vector.shape_cast %22 : vector<1x128x128xbf16> to vector<128x128xbf16>
    %c2_17 = arith.constant 2 : index
    %c0_18 = arith.constant 0 : index
    %c0_19 = arith.constant 0 : index
    %24 = vector.load %arg3[%c2_17, %c0_18, %c0_19] : memref<5x1x128xf32, #tpu.memory_space<vmem>>, vector<1x1x128xf32>
    %25 = vector.shape_cast %24 : vector<1x1x128xf32> to vector<1x128xf32>
    %cst_20 = arith.constant dense<0.000000e+00> : vector<16x128xf32>
    %26 = tpu.matmul %21, %23, %cst_20 {dimension_numbers = #tpu.dot_dimension_numbers<[1], [0], [0], [1], [0, 0, 1, 1], [], []>} : vector<16x128xbf16>, vector<128x128xbf16>, vector<16x128xf32> -> vector<16x128xf32>
    %27 = vector.broadcast %25 : vector<1x128xf32> to vector<16x128xf32>
    %28 = arith.addf %26, %27 : vector<16x128xf32>
    %cst_21 = arith.constant 0.000000e+00 : f32
    %29 = vector.broadcast %cst_21 : f32 to vector<16x128xf32>
    %30 = arith.maximumf %28, %29 : vector<16x128xf32>
    %31 = arith.truncf %30 : vector<16x128xf32> to vector<16x128xbf16>
    %c3 = arith.constant 3 : index
    %c0_22 = arith.constant 0 : index
    %c0_23 = arith.constant 0 : index
    %32 = vector.load %arg2[%c3, %c0_22, %c0_23] : memref<5x128x128xbf16, #tpu.memory_space<vmem>>, vector<1x128x128xbf16>
    %33 = vector.shape_cast %32 : vector<1x128x128xbf16> to vector<128x128xbf16>
    %c3_24 = arith.constant 3 : index
    %c0_25 = arith.constant 0 : index
    %c0_26 = arith.constant 0 : index
    %34 = vector.load %arg3[%c3_24, %c0_25, %c0_26] : memref<5x1x128xf32, #tpu.memory_space<vmem>>, vector<1x1x128xf32>
    %35 = vector.shape_cast %34 : vector<1x1x128xf32> to vector<1x128xf32>
    %cst_27 = arith.constant dense<0.000000e+00> : vector<16x128xf32>
    %36 = tpu.matmul %31, %33, %cst_27 {dimension_numbers = #tpu.dot_dimension_numbers<[1], [0], [0], [1], [0, 0, 1, 1], [], []>} : vector<16x128xbf16>, vector<128x128xbf16>, vector<16x128xf32> -> vector<16x128xf32>
    %37 = vector.broadcast %35 : vector<1x128xf32> to vector<16x128xf32>
    %38 = arith.addf %36, %37 : vector<16x128xf32>
    %cst_28 = arith.constant 0.000000e+00 : f32
    %39 = vector.broadcast %cst_28 : f32 to vector<16x128xf32>
    %40 = arith.maximumf %38, %39 : vector<16x128xf32>
    %41 = arith.truncf %40 : vector<16x128xf32> to vector<16x128xbf16>
    %c4 = arith.constant 4 : index
    %c0_29 = arith.constant 0 : index
    %c0_30 = arith.constant 0 : index
    %42 = vector.load %arg2[%c4, %c0_29, %c0_30] : memref<5x128x128xbf16, #tpu.memory_space<vmem>>, vector<1x128x128xbf16>
    %43 = vector.shape_cast %42 : vector<1x128x128xbf16> to vector<128x128xbf16>
    %c4_31 = arith.constant 4 : index
    %c0_32 = arith.constant 0 : index
    %c0_33 = arith.constant 0 : index
    %44 = vector.load %arg3[%c4_31, %c0_32, %c0_33] : memref<5x1x128xf32, #tpu.memory_space<vmem>>, vector<1x1x128xf32>
    %45 = vector.shape_cast %44 : vector<1x1x128xf32> to vector<1x128xf32>
    %cst_34 = arith.constant dense<0.000000e+00> : vector<16x128xf32>
    %46 = tpu.matmul %41, %43, %cst_34 {dimension_numbers = #tpu.dot_dimension_numbers<[1], [0], [0], [1], [0, 0, 1, 1], [], []>} : vector<16x128xbf16>, vector<128x128xbf16>, vector<16x128xf32> -> vector<16x128xf32>
    %47 = vector.broadcast %45 : vector<1x128xf32> to vector<16x128xf32>
    %48 = arith.addf %46, %47 : vector<16x128xf32>
    %cst_35 = arith.constant 0.000000e+00 : f32
    %49 = vector.broadcast %cst_35 : f32 to vector<16x128xf32>
    %50 = arith.maximumf %48, %49 : vector<16x128xf32>
    %51 = arith.truncf %50 : vector<16x128xf32> to vector<16x128xbf16>
    %c0_36 = arith.constant 0 : index
    %c0_37 = arith.constant 0 : index
    %52 = vector.load %arg4[%c0_36, %c0_37] : memref<16x128xbf16, #tpu.memory_space<vmem>>, vector<16x128xbf16>
    tpu.vector_store %arg4[%c0_36, %c0_37], %51 {strides = array<i32>} : memref<16x128xbf16, #tpu.memory_space<vmem>>, vector<16x128xbf16>,
    return
  }
  func.func @transform_0(%arg0: i32) -> (i32, i32) {
    %c0_i32 = arith.constant 0 : i32
    %c0_i32_0 = arith.constant 0 : i32
    return %arg0, %c0_i32 : i32, i32
  }
  func.func @transform_1(%arg0: i32) -> (i32, i32, i32) {
    %c0_i32 = arith.constant 0 : i32
    %c0_i32_0 = arith.constant 0 : i32
    %c0_i32_1 = arith.constant 0 : i32
    %c0_i32_2 = arith.constant 0 : i32
    return %c0_i32, %c0_i32_0, %c0_i32_1 : i32, i32, i32
  }
  func.func @transform_2(%arg0: i32) -> (i32, i32, i32) {
    %c0_i32 = arith.constant 0 : i32
    %c0_i32_0 = arith.constant 0 : i32
    %c0_i32_1 = arith.constant 0 : i32
    %c0_i32_2 = arith.constant 0 : i32
    return %c0_i32, %c0_i32_0, %c0_i32_1 : i32, i32, i32
  }
  func.func @transform_3(%arg0: i32) -> (i32, i32) {
    %c0_i32 = arith.constant 0 : i32
    %c0_i32_0 = arith.constant 0 : i32
    return %arg0, %c0_i32 : i32, i32
  }
}

</mosaic_0001>

<llo_original>
// kernel: fat_middle_linear.1
$region0: #{fat_middle_linear.1}
  #allocation0 [shape = 'u32[]', space=smem, size = 0x4, offset = 0x4, fixed_abs, tag = 'smem constant byte address 0x4 - core index']
  #allocation1 [shape = 'u32[144,128]{1,0:T(1,128)}', space=vmem, size = 0x12000, scoped, tag = 'internal scratch']
  %s0 = inlined_call_operand.vmem [shape: bf16[16,32], index: 0, kind: input, shape index: {}]
  %s1 = inlined_call_operand.hbm [shape: bf16[5,128,128], index: 1, kind: input, shape index: {}]
  %s2 = inlined_call_operand.vmem [shape: f32[5,1,128], index: 2, kind: input, shape index: {}]
  %s3 = inlined_call_operand.vmem [shape: bf16[16,128], index: 3, kind: output, shape index: {}]
  %s4 = sld [smem:[#allocation0]]
  $region26: #{fat_middle_linear.1} parent=0
    _
  %s6 = ssub.s32 1, %s4
  %s7 = scalar_select 0, %s6, %s4
  $region1: #{fat_middle_linear.1} parent=0
    #allocation2 [shape = 'u8[163840]{0}', space=vmem, size = 0x28000, scoped, tag = 'input window, operand 1, single buffered']
    #allocation3 [shape = 's32[1]{0}', space=sflag, size = 0x4, scoped, tag = 'scoped memory for fat_middle_linear.1']
    %8 = vsyncpa [#allocation3], 0
    // Predicated region
    $region2: #{fat_middle_linear.1} parent=1 // pred_check
      _
    $region3: #{fat_middle_linear.1} parent=1 // pred_check_branch
      %10 = sbr.rel (0) target = $region5
    $region4: #{fat_middle_linear.1} parent=1 // pred_region
      _
    $region5: #{fat_middle_linear.1} parent=1 // pred_fallthru
      _
    // Predicated region
    $region6: #{fat_middle_linear.1} parent=1 // pred_check
      _
    $region7: #{fat_middle_linear.1} parent=1 // pred_check_branch
      %12 = sbr.rel (0) target = $region9
    $region8: #{fat_middle_linear.1} parent=1 // pred_region
      %s14 = ssub.s32 5120, 5120
      %15 = vsyncadd [#allocation3], %s14
      %s16 = sshll.u32 [#allocation2], 4
      %s17 = int_to_ptr.vmem [resolvable:$true] %s16
      %22 = dma.hbm_to_vmem [thread:$0]  %s1, 5120, %s17, [#allocation3], 64, 64, 4
    $region9: #{fat_middle_linear.1} parent=1 // pred_fallthru
      _
    // Predicated region
    $region10: #{fat_middle_linear.1} parent=1 // pred_check
      _
    $region11: #{fat_middle_linear.1} parent=1 // pred_check_branch
      %24 = sbr.rel (0) target = $region13
    $region12: #{fat_middle_linear.1} parent=1 // pred_region
      _
    $region13: #{fat_middle_linear.1} parent=1 // pred_fallthru
      _
    // Predicated region
    $region14: #{fat_middle_linear.1} parent=1 // pred_check
      _
    $region15: #{fat_middle_linear.1} parent=1 // pred_check_branch
      %26 = sbr.rel (0) target = $region17
    $region16: #{fat_middle_linear.1} parent=1 // pred_region
      %27 = dma.done [#allocation3], 5120
    $region17: #{fat_middle_linear.1} parent=1 // pred_fallthru
      _
    %v29 = vld [vmem:[#allocation2] sm:$0xf]
    %v30 = vld [vmem:[#allocation2 + $0x4] sm:$0xf]
    %v31 = vld [vmem:[#allocation2 + $0x8] sm:$0xf]
    %v32 = vld [vmem:[#allocation2 + $0xc] sm:$0xf]
    %v33 = vld [vmem:[%s2] sm:$0x1]
    %v34 = vld [vmem:[%s0] sm:$0xf]
    %v35 = vld [vmem:[%s0 + $0x4] sm:$0xf]
    %v37 = vlaneseq
    %v38 = vshrl.u32 %v37, 7
    %v39 = vsub.s32 0, %v38
    %v40 = vrot.slane %v33, %v39
    %v44 = vunpack.c.l.b16 %v34
    %v45 = vunpack.c.l.b16 %v35
    %v46 = vpack.c.b16 %v45, %v44
    %v51 = vunpack.c.l.b16 %v29
    %v52 = vunpack.c.l.b16 %v30
    %v53 = vunpack.c.l.b16 %v31
    %v54 = vunpack.c.l.b16 %v32
    %v55 = vpack.c.b16 %v52, %v51
    %v56 = vpack.c.b16 %v54, %v53
    %vm59 = vcmask 261120
    %v61 = vsel %vm59, %v46, 0
    %63 = vmatprep.subr.bf16.mxu0 0
    %64 = vmatpush1.bf16.msra.mxu0 0
    %65 = vmatprep.subr.bf16.mxu0 0
    %66 = vmatpush1.bf16.msra.mxu0 0
    %67 = vmatprep.subr.bf16.mxu0 0
    %68 = vmatpush1.bf16.msra.mxu0 0
    %69 = vmatprep.subr.bf16.mxu0 0
    %70 = vmatpush1.bf16.msra.mxu0 0
    %71 = vmatprep.subr.bf16.mxu0 0
    %72 = vmatpush1.bf16.msra.mxu0 0
    %73 = vmatprep.subr.bf16.mxu0 0
    %74 = vmatpush1.bf16.msra.mxu0 0
    %75 = vmatprep.subr.bf16.mxu0 0
    %76 = vmatpush1.bf16.msra.mxu0 %v56
    %77 = vmatprep.subr.bf16.mxu0 0
    %78 = vmatpush1.bf16.msra.mxu0 %v55
    %79 = vmatprep.subr.bf16.mxu0 0
    %80 = vmatpush2.bf16.msra.mxu0 0
    %81 = vmatprep.subr.bf16.mxu0 0
    %82 = vmatpush2.bf16.msra.mxu0 0
    %83 = vmatprep.subr.bf16.mxu0 0
    %84 = vmatpush2.bf16.msra.mxu0 0
    %85 = vmatprep.subr.bf16.mxu0 0
    %86 = vmatpush2.bf16.msra.mxu0 0
    %87 = vmatprep.subr.bf16.mxu0 0
    %88 = vmatpush2.bf16.msra.mxu0 0
    %89 = vmatprep.subr.bf16.mxu0 0
    %90 = vmatpush2.bf16.msra.mxu0 0
    %91 = vmatprep.subr.bf16.mxu0 0
    %92 = vmatpush2.bf16.msra.mxu0 0
    %93 = vmatprep.subr.bf16.mxu0 0
    %94 = vmatpush2.bf16.msra.mxu0 0
    %95 = vmatprep.mubr.bf16.mxu0 0
    %96 = vmatmul.mubr.bf16.gmra.mxu0 %v61
    %v97 = vpop.f32.mrf.mxu0
    %v98 = vadd.f32 %v40, %v97
    %v99 = vpop.f32.mrf.mxu0
    %v100 = vpop.f32.mrf.mxu0
    %v101 = vadd.f32 %v40, %v100
    %v102 = vpop.f32.mrf.mxu0
    %103 = vdwg.mxu0
    %v104 = vmax.f32 %v98, 0.0
    %v105 = vmax.f32 %v101, 0.0
    %v106 = vpack.c.bf16 %v105, %v104
    %s107 = scalar_lea.vmem [#allocation2], 64
    %v108 = vld [vmem:[%s107] sm:$0xf]
    %v109 = vld [vmem:[%s107 + $0x4] sm:$0xf]
    %v110 = vld [vmem:[%s107 + $0x8] sm:$0xf]
    %v111 = vld [vmem:[%s107 + $0xc] sm:$0xf]
    %v112 = vld [vmem:[%s107 + $0x10] sm:$0xf]
    %v113 = vld [vmem:[%s107 + $0x14] sm:$0xf]
    %v114 = vld [vmem:[%s107 + $0x18] sm:$0xf]
    %v115 = vld [vmem:[%s107 + $0x1c] sm:$0xf]
    %v116 = vld [vmem:[%s107 + $0x20] sm:$0xf]
    %v117 = vld [vmem:[%s107 + $0x24] sm:$0xf]
    %v118 = vld [vmem:[%s107 + $0x28] sm:$0xf]
    %v119 = vld [vmem:[%s107 + $0x2c] sm:$0xf]
    %v120 = vld [vmem:[%s107 + $0x30] sm:$0xf]
    %v121 = vld [vmem:[%s107 + $0x34] sm:$0xf]
    %v122 = vld [vmem:[%s107 + $0x38] sm:$0xf]
    %v123 = vld [vmem:[%s107 + $0x3c] sm:$0xf]
    %s124 = scalar_lea.vmem %s2, 1
    %v125 = vld [vmem:[%s124] sm:$0x1]
    %v127 = vlaneseq
    %v128 = vshrl.u32 %v127, 7
    %v129 = vsub.s32 0, %v128
    %v130 = vrot.slane %v125, %v129
    %v148 = vunpack.c.l.b16 %v108
    %v149 = vunpack.c.l.b16 %v109
    %v150 = vunpack.c.l.b16 %v110
    %v151 = vunpack.c.l.b16 %v111
    %v152 = vunpack.c.l.b16 %v112
    %v153 = vunpack.c.l.b16 %v113
    %v154 = vunpack.c.l.b16 %v114
    %v155 = vunpack.c.l.b16 %v115
    %v156 = vunpack.c.l.b16 %v116
    %v157 = vunpack.c.l.b16 %v117
    %v158 = vunpack.c.l.b16 %v118
    %v159 = vunpack.c.l.b16 %v119
    %v160 = vunpack.c.l.b16 %v120
    %v161 = vunpack.c.l.b16 %v121
    %v162 = vunpack.c.l.b16 %v122
    %v163 = vunpack.c.l.b16 %v123
    %v164 = vpack.c.b16 %v149, %v148
    %v165 = vpack.c.b16 %v151, %v150
    %v166 = vpack.c.b16 %v153, %v152
    %v167 = vpack.c.b16 %v155, %v154
    %v168 = vpack.c.b16 %v157, %v156
    %v169 = vpack.c.b16 %v159, %v158
    %v170 = vpack.c.b16 %v161, %v160
    %v171 = vpack.c.b16 %v163, %v162
    %180 = vmatprep.subr.bf16.mxu0 0
    %181 = vmatpush1.bf16.msra.mxu0 %v171
    %182 = vmatprep.subr.bf16.mxu0 0
    %183 = vmatpush1.bf16.msra.mxu0 %v170
    %184 = vmatprep.subr.bf16.mxu0 0
    %185 = vmatpush1.bf16.msra.mxu0 %v169
    %186 = vmatprep.subr.bf16.mxu0 0
    %187 = vmatpush1.bf16.msra.mxu0 %v168
    %188 = vmatprep.subr.bf16.mxu0 0
    %189 = vmatpush1.bf16.msra.mxu0 %v167
    %190 = vmatprep.subr.bf16.mxu0 0
    %191 = vmatpush1.bf16.msra.mxu0 %v166
    %192 = vmatprep.subr.bf16.mxu0 0
    %193 = vmatpush1.bf16.msra.mxu0 %v165
    %194 = vmatprep.subr.bf16.mxu0 0
    %195 = vmatpush1.bf16.msra.mxu0 %v164
    %196 = vmatprep.subr.bf16.mxu0 0
    %197 = vmatpush2.bf16.msra.mxu0 0
    %198 = vmatprep.subr.bf16.mxu0 0
    %199 = vmatpush2.bf16.msra.mxu0 0
    %200 = vmatprep.subr.bf16.mxu0 0
    %201 = vmatpush2.bf16.msra.mxu0 0
    %202 = vmatprep.subr.bf16.mxu0 0
    %203 = vmatpush2.bf16.msra.mxu0 0
    %204 = vmatprep.subr.bf16.mxu0 0
    %205 = vmatpush2.bf16.msra.mxu0 0
    %206 = vmatprep.subr.bf16.mxu0 0
    %207 = vmatpush2.bf16.msra.mxu0 0
    %208 = vmatprep.subr.bf16.mxu0 0
    %209 = vmatpush2.bf16.msra.mxu0 0
    %210 = vmatprep.subr.bf16.mxu0 0
    %211 = vmatpush2.bf16.msra.mxu0 0
    %212 = vmatprep.mubr.bf16.mxu0 0
    %213 = vmatmul.mubr.bf16.gmra.mxu0 %v106
    %v214 = vpop.f32.mrf.mxu0
    %v215 = vadd.f32 %v130, %v214
    %v216 = vpop.f32.mrf.mxu0
    %v217 = vpop.f32.mrf.mxu0
    %v218 = vadd.f32 %v130, %v217
    %v219 = vpop.f32.mrf.mxu0
    %220 = vdwg.mxu0
    %v221 = vmax.f32 %v215, 0.0
    %v222 = vmax.f32 %v218, 0.0
    %v223 = vpack.c.bf16 %v222, %v221
    %s224 = scalar_lea.vmem [#allocation2], 128
    %v225 = vld [vmem:[%s224] sm:$0xf]
    %v226 = vld [vmem:[%s224 + $0x4] sm:$0xf]
    %v227 = vld [vmem:[%s224 + $0x8] sm:$0xf]
    %v228 = vld [vmem:[%s224 + $0xc] sm:$0xf]
    %v229 = vld [vmem:[%s224 + $0x10] sm:$0xf]
    %v230 = vld [vmem:[%s224 + $0x14] sm:$0xf]
    %v231 = vld [vmem:[%s224 + $0x18] sm:$0xf]
    %v232 = vld [vmem:[%s224 + $0x1c] sm:$0xf]
    %v233 = vld [vmem:[%s224 + $0x20] sm:$0xf]
    %v234 = vld [vmem:[%s224 + $0x24] sm:$0xf]
    %v235 = vld [vmem:[%s224 + $0x28] sm:$0xf]
    %v236 = vld [vmem:[%s224 + $0x2c] sm:$0xf]
    %v237 = vld [vmem:[%s224 + $0x30] sm:$0xf]
    %v238 = vld [vmem:[%s224 + $0x34] sm:$0xf]
    %v239 = vld [vmem:[%s224 + $0x38] sm:$0xf]
    %v240 = vld [vmem:[%s224 + $0x3c] sm:$0xf]
    %s241 = scalar_lea.vmem %s2, 2
    %v242 = vld [vmem:[%s241] sm:$0x1]
    %v244 = vlaneseq
    %v245 = vshrl.u32 %v244, 7
    %v246 = vsub.s32 0, %v245
    %v247 = vrot.slane %v242, %v246
    %v265 = vunpack.c.l.b16 %v225
    %v266 = vunpack.c.l.b16 %v226
    %v267 = vunpack.c.l.b16 %v227
    %v268 = vunpack.c.l.b16 %v228
    %v269 = vunpack.c.l.b16 %v229
    %v270 = vunpack.c.l.b16 %v230
    %v271 = vunpack.c.l.b16 %v231
    %v272 = vunpack.c.l.b16 %v232
    %v273 = vunpack.c.l.b16 %v233
    %v274 = vunpack.c.l.b16 %v234
    %v275 = vunpack.c.l.b16 %v235
    %v276 = vunpack.c.l.b16 %v236
    %v277 = vunpack.c.l.b16 %v237
    %v278 = vunpack.c.l.b16 %v238
    %v279 = vunpack.c.l.b16 %v239
    %v280 = vunpack.c.l.b16 %v240
    %v281 = vpack.c.b16 %v266, %v265
    %v282 = vpack.c.b16 %v268, %v267
    %v283 = vpack.c.b16 %v270, %v269
    %v284 = vpack.c.b16 %v272, %v271
    %v285 = vpack.c.b16 %v274, %v273
    %v286 = vpack.c.b16 %v276, %v275
    %v287 = vpack.c.b16 %v278, %v277
    %v288 = vpack.c.b16 %v280, %v279
    %297 = vmatprep.subr.bf16.mxu0 0
    %298 = vmatpush1.bf16.msra.mxu0 %v288
    %299 = vmatprep.subr.bf16.mxu0 0
    %300 = vmatpush1.bf16.msra.mxu0 %v287
    %301 = vmatprep.subr.bf16.mxu0 0
    %302 = vmatpush1.bf16.msra.mxu0 %v286
    %303 = vmatprep.subr.bf16.mxu0 0
    %304 = vmatpush1.bf16.msra.mxu0 %v285
    %305 = vmatprep.subr.bf16.mxu0 0
    %306 = vmatpush1.bf16.msra.mxu0 %v284
    %307 = vmatprep.subr.bf16.mxu0 0
    %308 = vmatpush1.bf16.msra.mxu0 %v283
    %309 = vmatprep.subr.bf16.mxu0 0
    %310 = vmatpush1.bf16.msra.mxu0 %v282
    %311 = vmatprep.subr.bf16.mxu0 0
    %312 = vmatpush1.bf16.msra.mxu0 %v281
    %313 = vmatprep.subr.bf16.mxu0 0
    %314 = vmatpush2.bf16.msra.mxu0 0
    %315 = vmatprep.subr.bf16.mxu0 0
    %316 = vmatpush2.bf16.msra.mxu0 0
    %317 = vmatprep.subr.bf16.mxu0 0
    %318 = vmatpush2.bf16.msra.mxu0 0
    %319 = vmatprep.subr.bf16.mxu0 0
    %320 = vmatpush2.bf16.msra.mxu0 0
    %321 = vmatprep.subr.bf16.mxu0 0
    %322 = vmatpush2.bf16.msra.mxu0 0
    %323 = vmatprep.subr.bf16.mxu0 0
    %324 = vmatpush2.bf16.msra.mxu0 0
    %325 = vmatprep.subr.bf16.mxu0 0
    %326 = vmatpush2.bf16.msra.mxu0 0
    %327 = vmatprep.subr.bf16.mxu0 0
    %328 = vmatpush2.bf16.msra.mxu0 0
    %329 = vmatprep.mubr.bf16.mxu0 0
    %330 = vmatmul.mubr.bf16.gmra.mxu0 %v223
    %v331 = vpop.f32.mrf.mxu0
    %v332 = vadd.f32 %v247, %v331
    %v333 = vpop.f32.mrf.mxu0
    %v334 = vpop.f32.mrf.mxu0
    %v335 = vadd.f32 %v247, %v334
    %v336 = vpop.f32.mrf.mxu0
    %337 = vdwg.mxu0
    %v338 = vmax.f32 %v332, 0.0
    %v339 = vmax.f32 %v335, 0.0
    %v340 = vpack.c.bf16 %v339, %v338
    %s341 = scalar_lea.vmem [#allocation2], 192
    %v342 = vld [vmem:[%s341] sm:$0xf]
    %v343 = vld [vmem:[%s341 + $0x4] sm:$0xf]
    %v344 = vld [vmem:[%s341 + $0x8] sm:$0xf]
    %v345 = vld [vmem:[%s341 + $0xc] sm:$0xf]
    %v346 = vld [vmem:[%s341 + $0x10] sm:$0xf]
    %v347 = vld [vmem:[%s341 + $0x14] sm:$0xf]
    %v348 = vld [vmem:[%s341 + $0x18] sm:$0xf]
    %v349 = vld [vmem:[%s341 + $0x1c] sm:$0xf]
    %v350 = vld [vmem:[%s341 + $0x20] sm:$0xf]
    %v351 = vld [vmem:[%s341 + $0x24] sm:$0xf]
    %v352 = vld [vmem:[%s341 + $0x28] sm:$0xf]
    %v353 = vld [vmem:[%s341 + $0x2c] sm:$0xf]
    %v354 = vld [vmem:[%s341 + $0x30] sm:$0xf]
    %v355 = vld [vmem:[%s341 + $0x34] sm:$0xf]
    %v356 = vld [vmem:[%s341 + $0x38] sm:$0xf]
    %v357 = vld [vmem:[%s341 + $0x3c] sm:$0xf]
    %s358 = scalar_lea.vmem %s2, 3
    %v359 = vld [vmem:[%s358] sm:$0x1]
    %v361 = vlaneseq
    %v362 = vshrl.u32 %v361, 7
    %v363 = vsub.s32 0, %v362
    %v364 = vrot.slane %v359, %v363
    %v382 = vunpack.c.l.b16 %v342
    %v383 = vunpack.c.l.b16 %v343
    %v384 = vunpack.c.l.b16 %v344
    %v385 = vunpack.c.l.b16 %v345
    %v386 = vunpack.c.l.b16 %v346
    %v387 = vunpack.c.l.b16 %v347
    %v388 = vunpack.c.l.b16 %v348
    %v389 = vunpack.c.l.b16 %v349
    %v390 = vunpack.c.l.b16 %v350
    %v391 = vunpack.c.l.b16 %v351
    %v392 = vunpack.c.l.b16 %v352
    %v393 = vunpack.c.l.b16 %v353
    %v394 = vunpack.c.l.b16 %v354
    %v395 = vunpack.c.l.b16 %v355
    %v396 = vunpack.c.l.b16 %v356
    %v397 = vunpack.c.l.b16 %v357
    %v398 = vpack.c.b16 %v383, %v382
    %v399 = vpack.c.b16 %v385, %v384
    %v400 = vpack.c.b16 %v387, %v386
    %v401 = vpack.c.b16 %v389, %v388
    %v402 = vpack.c.b16 %v391, %v390
    %v403 = vpack.c.b16 %v393, %v392
    %v404 = vpack.c.b16 %v395, %v394
    %v405 = vpack.c.b16 %v397, %v396
    %414 = vmatprep.subr.bf16.mxu0 0
    %415 = vmatpush1.bf16.msra.mxu0 %v405
    %416 = vmatprep.subr.bf16.mxu0 0
    %417 = vmatpush1.bf16.msra.mxu0 %v404
    %418 = vmatprep.subr.bf16.mxu0 0
    %419 = vmatpush1.bf16.msra.mxu0 %v403
    %420 = vmatprep.subr.bf16.mxu0 0
    %421 = vmatpush1.bf16.msra.mxu0 %v402
    %422 = vmatprep.subr.bf16.mxu0 0
    %423 = vmatpush1.bf16.msra.mxu0 %v401
    %424 = vmatprep.subr.bf16.mxu0 0
    %425 = vmatpush1.bf16.msra.mxu0 %v400
    %426 = vmatprep.subr.bf16.mxu0 0
    %427 = vmatpush1.bf16.msra.mxu0 %v399
    %428 = vmatprep.subr.bf16.mxu0 0
    %429 = vmatpush1.bf16.msra.mxu0 %v398
    %430 = vmatprep.subr.bf16.mxu0 0
    %431 = vmatpush2.bf16.msra.mxu0 0
    %432 = vmatprep.subr.bf16.mxu0 0
    %433 = vmatpush2.bf16.msra.mxu0 0
    %434 = vmatprep.subr.bf16.mxu0 0
    %435 = vmatpush2.bf16.msra.mxu0 0
    %436 = vmatprep.subr.bf16.mxu0 0
    %437 = vmatpush2.bf16.msra.mxu0 0
    %438 = vmatprep.subr.bf16.mxu0 0
    %439 = vmatpush2.bf16.msra.mxu0 0
    %440 = vmatprep.subr.bf16.mxu0 0
    %441 = vmatpush2.bf16.msra.mxu0 0
    %442 = vmatprep.subr.bf16.mxu0 0
    %443 = vmatpush2.bf16.msra.mxu0 0
    %444 = vmatprep.subr.bf16.mxu0 0
    %445 = vmatpush2.bf16.msra.mxu0 0
    %446 = vmatprep.mubr.bf16.mxu0 0
    %447 = vmatmul.mubr.bf16.gmra.mxu0 %v340
    %v448 = vpop.f32.mrf.mxu0
    %v449 = vadd.f32 %v364, %v448
    %v450 = vpop.f32.mrf.mxu0
    %v451 = vpop.f32.mrf.mxu0
    %v452 = vadd.f32 %v364, %v451
    %v453 = vpop.f32.mrf.mxu0
    %454 = vdwg.mxu0
    %v455 = vmax.f32 %v449, 0.0
    %v456 = vmax.f32 %v452, 0.0
    %v457 = vpack.c.bf16 %v456, %v455
    %s458 = scalar_lea.vmem [#allocation2], 256
    %v459 = vld [vmem:[%s458] sm:$0xf]
    %v460 = vld [vmem:[%s458 + $0x4] sm:$0xf]
    %v461 = vld [vmem:[%s458 + $0x8] sm:$0xf]
    %v462 = vld [vmem:[%s458 + $0xc] sm:$0xf]
    %v463 = vld [vmem:[%s458 + $0x10] sm:$0xf]
    %v464 = vld [vmem:[%s458 + $0x14] sm:$0xf]
    %v465 = vld [vmem:[%s458 + $0x18] sm:$0xf]
    %v466 = vld [vmem:[%s458 + $0x1c] sm:$0xf]
    %v467 = vld [vmem:[%s458 + $0x20] sm:$0xf]
    %v468 = vld [vmem:[%s458 + $0x24] sm:$0xf]
    %v469 = vld [vmem:[%s458 + $0x28] sm:$0xf]
    %v470 = vld [vmem:[%s458 + $0x2c] sm:$0xf]
    %v471 = vld [vmem:[%s458 + $0x30] sm:$0xf]
    %v472 = vld [vmem:[%s458 + $0x34] sm:$0xf]
    %v473 = vld [vmem:[%s458 + $0x38] sm:$0xf]
    %v474 = vld [vmem:[%s458 + $0x3c] sm:$0xf]
    %s475 = scalar_lea.vmem %s2, 4
    %v476 = vld [vmem:[%s475] sm:$0x1]
    %v478 = vlaneseq
    %v479 = vshrl.u32 %v478, 7
    %v480 = vsub.s32 0, %v479
    %v481 = vrot.slane %v476, %v480
    %v499 = vunpack.c.l.b16 %v459
    %v500 = vunpack.c.l.b16 %v460
    %v501 = vunpack.c.l.b16 %v461
    %v502 = vunpack.c.l.b16 %v462
    %v503 = vunpack.c.l.b16 %v463
    %v504 = vunpack.c.l.b16 %v464
    %v505 = vunpack.c.l.b16 %v465
    %v506 = vunpack.c.l.b16 %v466
    %v507 = vunpack.c.l.b16 %v467
    %v508 = vunpack.c.l.b16 %v468
    %v509 = vunpack.c.l.b16 %v469
    %v510 = vunpack.c.l.b16 %v470
    %v511 = vunpack.c.l.b16 %v471
    %v512 = vunpack.c.l.b16 %v472
    %v513 = vunpack.c.l.b16 %v473
    %v514 = vunpack.c.l.b16 %v474
    %v515 = vpack.c.b16 %v500, %v499
    %v516 = vpack.c.b16 %v502, %v501
    %v517 = vpack.c.b16 %v504, %v503
    %v518 = vpack.c.b16 %v506, %v505
    %v519 = vpack.c.b16 %v508, %v507
    %v520 = vpack.c.b16 %v510, %v509
    %v521 = vpack.c.b16 %v512, %v511
    %v522 = vpack.c.b16 %v514, %v513
    %531 = vmatprep.subr.bf16.mxu0 0
    %532 = vmatpush1.bf16.msra.mxu0 %v522
    %533 = vmatprep.subr.bf16.mxu0 0
    %534 = vmatpush1.bf16.msra.mxu0 %v521
    %535 = vmatprep.subr.bf16.mxu0 0
    %536 = vmatpush1.bf16.msra.mxu0 %v520
    %537 = vmatprep.subr.bf16.mxu0 0
    %538 = vmatpush1.bf16.msra.mxu0 %v519
    %539 = vmatprep.subr.bf16.mxu0 0
    %540 = vmatpush1.bf16.msra.mxu0 %v518
    %541 = vmatprep.subr.bf16.mxu0 0
    %542 = vmatpush1.bf16.msra.mxu0 %v517
    %543 = vmatprep.subr.bf16.mxu0 0
    %544 = vmatpush1.bf16.msra.mxu0 %v516
    %545 = vmatprep.subr.bf16.mxu0 0
    %546 = vmatpush1.bf16.msra.mxu0 %v515
    %547 = vmatprep.subr.bf16.mxu0 0
    %548 = vmatpush2.bf16.msra.mxu0 0
    %549 = vmatprep.subr.bf16.mxu0 0
    %550 = vmatpush2.bf16.msra.mxu0 0
    %551 = vmatprep.subr.bf16.mxu0 0
    %552 = vmatpush2.bf16.msra.mxu0 0
    %553 = vmatprep.subr.bf16.mxu0 0
    %554 = vmatpush2.bf16.msra.mxu0 0
    %555 = vmatprep.subr.bf16.mxu0 0
    %556 = vmatpush2.bf16.msra.mxu0 0
    %557 = vmatprep.subr.bf16.mxu0 0
    %558 = vmatpush2.bf16.msra.mxu0 0
    %559 = vmatprep.subr.bf16.mxu0 0
    %560 = vmatpush2.bf16.msra.mxu0 0
    %561 = vmatprep.subr.bf16.mxu0 0
    %562 = vmatpush2.bf16.msra.mxu0 0
    %563 = vmatprep.mubr.bf16.mxu0 0
    %564 = vmatmul.mubr.bf16.gmra.mxu0 %v457
    %v565 = vpop.f32.mrf.mxu0
    %v566 = vadd.f32 %v481, %v565
    %v567 = vpop.f32.mrf.mxu0
    %v568 = vpop.f32.mrf.mxu0
    %v569 = vadd.f32 %v481, %v568
    %v570 = vpop.f32.mrf.mxu0
    %571 = vdwg.mxu0
    %v572 = vmax.f32 %v566, 0.0
    %v573 = vmax.f32 %v569, 0.0
    %v574 = vpack.c.bf16 %v573, %v572
    %v576 = vunpack.c.l.b16 %v574
    %v577 = vunpack.c.h.b16 %v574
    %v578 = vpack.c.b16 %v576, %v576
    %v579 = vpack.c.b16 %v577, %v577
    %582 = vst [vmem:[%s3] sm:$0xf] %v578
    %583 = vst [vmem:[%s3 + $0x4] sm:$0xf] %v579
    // Predicated region
    $region18: #{fat_middle_linear.1} parent=1 // pred_check
      _
    $region19: #{fat_middle_linear.1} parent=1 // pred_check_branch
      %585 = sbr.rel (0) target = $region21
    $region20: #{fat_middle_linear.1} parent=1 // pred_region
      _
    $region21: #{fat_middle_linear.1} parent=1 // pred_fallthru
      _
    // Predicated region
    $region22: #{fat_middle_linear.1} parent=1 // pred_check
      _
    $region23: #{fat_middle_linear.1} parent=1 // pred_check_branch
      %587 = sbr.rel (0) target = $region25
    $region24: #{fat_middle_linear.1} parent=1 // pred_region
      _
    $region25: #{fat_middle_linear.1} parent=1 // pred_fallthru
      _
    %588 = vsyncpa [#allocation3], 1

</llo_original>
